<compile_context>
chip_gen: v7x
topology: tpu7x:2x2x1
jax: 0.10.0
libtpu: 0.0.40
codegen_flags: <defaults>
</compile_context>

<pallas_src>
import math

import jax
import jax.numpy as jnp
from jax.experimental import pallas as pl
from jax.experimental.pallas import tpu as pltpu


# -----------------------------------------------------------------------------
# Kernel 1: tiled matvec  scores_tile = x_tile @ scorer_hat  (+ mask_tile)
# -----------------------------------------------------------------------------
def _score_kernel(x_ref, w_ref, s_ref):
    s_ref[...] = jnp.dot(x_ref[...], w_ref[...], preferred_element_type=jnp.float32)


def _score_mask_kernel(x_ref, w_ref, m_ref, s_ref):
    s_ref[...] = (
        jnp.dot(x_ref[...], w_ref[...], preferred_element_type=jnp.float32)
        + m_ref[...]
    )


def _pick_tile_rows(N, F, has_mask, *, vmem_budget_bytes=24 << 20, max_tile_rows=None):
    """Largest row tile whose double-buffered VMEM footprint fits the budget.

    Per row: input tile pads the lane dim to >=128 lanes; the (tm,1) score
    output (and optional mask) blocks also pad to 128 lanes, so include them.
    Budget is kept conservative so the kernel stays under the scoped-VMEM
    limit on v7x (64 MiB physical) as well as v5e's smaller default.
    """
    bytes_per_row = (max(F, 128) + 128 + (128 if has_mask else 0)) * 4
    cap = max(8, vmem_budget_bytes // (2 * bytes_per_row))  # x2: double-buffered
    if max_tile_rows is not None:
        cap = min(cap, max(8, max_tile_rows))
    if N <= cap:
        return N                      # single exact tile (full-dim, no 8-row rule)
    tm = min(cap, pl.cdiv(N, 2))      # keep grid >= 2 so both v7x TCs get work
    return max(8, (tm // 8) * 8)


def compute_scores(node_embs, scorer_hat, mask=None, *, max_tile_rows=None):
    N, F = node_embs.shape
    tm = _pick_tile_rows(N, F, mask is not None, max_tile_rows=max_tile_rows)
    grid = (pl.cdiv(N, tm),)

    in_specs = [
        pl.BlockSpec((tm, F), lambda i: (i, 0)),   # node_embs tile, pipelined over N
        pl.BlockSpec((F, 1), lambda i: (0, 0)),    # normalized scorer, resident
    ]
    args = [node_embs, scorer_hat]
    kernel = _score_kernel
    if mask is not None:
        in_specs.append(pl.BlockSpec((tm, 1), lambda i: (i, 0)))
        args.append(mask)
        kernel = _score_mask_kernel

    return pl.pallas_call(
        kernel,
        out_shape=jax.ShapeDtypeStruct((N, 1), jnp.float32),
        grid=grid,
        in_specs=in_specs,
        out_specs=pl.BlockSpec((tm, 1), lambda i: (i, 0)),
        compiler_params=pltpu.CompilerParams(
            dimension_semantics=("parallel",),     # independent N tiles (megacore)
            vmem_limit_bytes=40 * 1024 * 1024,     # headroom for the big tiles; < v7x phys
        ),
    )(*args)


# -----------------------------------------------------------------------------
# Kernel 2: single-step manual gather of the k selected rows + tanh-score scale
# -----------------------------------------------------------------------------
def _gather_scale_kernel(idx_ref, x_hbm, t_ref, o_ref, xbuf, sems):
    # idx_ref: SMEM (k,) int32 top-k row indices (scalar-prefetched)
    # x_hbm:   full node_embs, left in HBM (memory_space=pl.ANY)
    # t_ref:   VMEM (k,1) precomputed tanh(top-k scores)
    # o_ref:   VMEM (k,F) output block
    # xbuf:    VMEM (k,F) scratch, sems: per-row DMA semaphores
    k = o_ref.shape[0]
    # Issue all k single-row gathers back-to-back so their latencies overlap.
    for i in range(k):
        pltpu.make_async_copy(
            x_hbm.at[pl.ds(idx_ref[i], 1), :],
            xbuf.at[pl.ds(i, 1), :],
            sems.at[i],
        ).start()
    for i in range(k):
        pltpu.make_async_copy(
            x_hbm.at[pl.ds(0, 1), :],          # dummy src; wait only needs sem + size
            xbuf.at[pl.ds(i, 1), :],
            sems.at[i],
        ).wait()
    # One vectorized scale + one dense (k, F) store.
    o_ref[...] = (xbuf[...] * t_ref[...]).astype(o_ref.dtype)


def gather_and_scale(node_embs, tanh_scores, topk_idx):
    N, F = node_embs.shape
    k = int(topk_idx.shape[0])
    return pl.pallas_call(
        _gather_scale_kernel,
        out_shape=jax.ShapeDtypeStruct((k, F), node_embs.dtype),
        grid_spec=pltpu.PrefetchScalarGridSpec(
            num_scalar_prefetch=1,
            grid=(1,),
            in_specs=[
                pl.BlockSpec(memory_space=pl.ANY),            # node_embs stays in HBM
                pl.BlockSpec((k, 1), lambda i, idx: (0, 0)),  # tanh(top-k scores)
            ],
            out_specs=pl.BlockSpec((k, F), lambda i, idx: (0, 0)),
            scratch_shapes=[
                pltpu.VMEM((k, F), node_embs.dtype),
                pltpu.SemaphoreType.DMA((k,)),
            ],
        ),
        compiler_params=pltpu.CompilerParams(
            dimension_semantics=("arbitrary",),
        ),
    )(topk_idx, node_embs, tanh_scores)


# -----------------------------------------------------------------------------
# Module forward (glue)
# -----------------------------------------------------------------------------
_SMALL_PROBLEM_BYTES = 256 * 1024   # below this, Pallas launch overhead dominates


def _topk_forward_xla(node_embs, scorer, k, mask=None):
    """Pure-XLA reference / small-problem fast path (same semantics)."""
    scores = node_embs @ scorer / jnp.linalg.norm(scorer)
    if mask is not None:
        scores = scores + mask
    vals, idx = jax.lax.top_k(scores.reshape(-1), k)
    valid = vals > -jnp.inf
    last = jnp.maximum(jnp.sum(valid.astype(jnp.int32)) - 1, 0)
    idx = jnp.where(valid, idx, idx[last])        # pad_with_last_val
    vals = jnp.where(valid, vals, vals[last])
    out = node_embs[idx] * jnp.tanh(vals)[:, None]
    return out.T


def topk_forward(node_embs, scorer, k, mask=None, *, force_pallas=False,
                 score_tile_rows=None):
    nbytes = node_embs.size * node_embs.dtype.itemsize
    if not force_pallas and nbytes < _SMALL_PROBLEM_BYTES:
        # Tiny problems: two pallas_calls + glue are pure fixed overhead.
        return _topk_forward_xla(node_embs, scorer, k, mask)

    scorer = scorer.astype(jnp.float32)
    # Normalize the scorer once in the wrapper (hoisted out of the tiled kernel).
    scorer_hat = scorer * jax.lax.rsqrt(jnp.sum(scorer * scorer))
    scores = compute_scores(node_embs, scorer_hat, mask,
                            max_tile_rows=score_tile_rows)       # (N, 1), mask fused
    # TODO(synk): top-k selection itself has no Pallas primitive; done in plain JAX.
    vals, idx = jax.lax.top_k(scores.reshape(-1), k)
    idx = idx.astype(jnp.int32)
    # -inf filtering + pad_with_last_val, static-shape version.
    valid = vals > -jnp.inf
    last = jnp.maximum(jnp.sum(valid.astype(jnp.int32)) - 1, 0)
    idx = jnp.where(valid, idx, idx[last])
    vals = jnp.where(valid, vals, vals[last])
    tanh_scores = jnp.tanh(vals).reshape(k, 1).astype(jnp.float32)
    out = gather_and_scale(node_embs, tanh_scores, idx)          # (k, F)
    # Keep (k,F) in-kernel; the tiny (F,k) transpose is cheaper in XLA when k < 128.
    return out.T


# -----------------------------------------------------------------------------
if __name__ == "__main__":
    key = jax.random.PRNGKey(0)
    feats, N, k = 128, 1024, 8

    kx, kw = jax.random.split(key)
    node_embs = jax.random.normal(kx, (N, feats), dtype=jnp.float32)

    # Deterministic init mirroring reset_param: uniform(-stdv, stdv), stdv = 1/sqrt(feats)
    stdv = 1.0 / math.sqrt(feats)
    scorer = jax.random.uniform(
        kw, (feats, 1), minval=-stdv, maxval=stdv, dtype=jnp.float32
    )

    # Test 1: no mask, default (single big) tile.
    out = topk_forward(node_embs, scorer, k, force_pallas=True)
    out = jax.block_until_ready(out)
    assert out.shape == (feats, k), out.shape
    ref = _topk_forward_xla(node_embs, scorer, k)
    assert jnp.allclose(out, ref, atol=1e-4, rtol=1e-4)

    # Test 2: -inf mask (exercises fused mask + pad_with_last_val) and a forced
    # small tile so the score kernel runs the multi-tile pipelined path.
    mask = jnp.zeros((N, 1), jnp.float32).at[4:].set(-jnp.inf)  # only 4 valid, k=8
    out_m = topk_forward(node_embs, scorer, k, mask, force_pallas=True,
                         score_tile_rows=256)
    out_m = jax.block_until_ready(out_m)
    assert out_m.shape == (feats, k), out_m.shape
    ref_m = _topk_forward_xla(node_embs, scorer, k, mask)
    assert jnp.allclose(out_m, ref_m, atol=1e-4, rtol=1e-4)

    print("KERNEL_OK")
</pallas_src>

<mosaic_0001>
module attributes {stable_mosaic.version = 11 : i64} {
  func.func @_score_kernel(%arg0: i32, %arg1: memref<1024x128xf32, #tpu.memory_space<vmem>>, %arg2: memref<128x1xf32, #tpu.memory_space<vmem>>, %arg3: memref<1024x1xf32, #tpu.memory_space<vmem>>) attributes {dimension_semantics = [#tpu.dimension_semantics<parallel>], iteration_bounds = array<i64: 1>, scalar_prefetch = 0 : i64, scratch_operands = 0 : i64, tpu.core_type = #tpu.core_type<tc>, window_params = [{transform_indices = @transform_0, window_bounds = array<i64: 1024, 128>}, {pipeline_mode = #tpu.pipeline_mode<synchronous>, transform_indices = @transform_1, window_bounds = array<i64: 128, 1>}, {transform_indices = @transform_2, window_bounds = array<i64: 1024, 1>}]} {
    %c0 = arith.constant 0 : index
    %c0_0 = arith.constant 0 : index
    %0 = vector.load %arg1[%c0, %c0_0] : memref<1024x128xf32, #tpu.memory_space<vmem>>, vector<1024x128xf32>
    %c0_1 = arith.constant 0 : index
    %c0_2 = arith.constant 0 : index
    %1 = vector.load %arg2[%c0_1, %c0_2] : memref<128x1xf32, #tpu.memory_space<vmem>>, vector<128x1xf32>
    %cst = arith.constant dense<0.000000e+00> : vector<1024x1xf32>
    %2 = tpu.matmul %0, %1, %cst {dimension_numbers = #tpu.dot_dimension_numbers<[1], [0], [0], [1], [0, 0, 1, 1], [], []>} : vector<1024x128xf32>, vector<128x1xf32>, vector<1024x1xf32> -> vector<1024x1xf32>
    %c0_3 = arith.constant 0 : index
    %c0_4 = arith.constant 0 : index
    %3 = vector.load %arg3[%c0_3, %c0_4] : memref<1024x1xf32, #tpu.memory_space<vmem>>, vector<1024x1xf32>
    tpu.vector_store %arg3[%c0_3, %c0_4], %2 {strides = array<i32>} : memref<1024x1xf32, #tpu.memory_space<vmem>>, vector<1024x1xf32>,
    return
  }
  func.func @transform_0(%arg0: i32) -> (i32, i32) {
    %c0_i32 = arith.constant 0 : i32
    %c0_i32_0 = arith.constant 0 : i32
    return %arg0, %c0_i32 : i32, i32
  }
  func.func @transform_1(%arg0: i32) -> (i32, i32) {
    %c0_i32 = arith.constant 0 : i32
    %c0_i32_0 = arith.constant 0 : i32
    %c0_i32_1 = arith.constant 0 : i32
    return %c0_i32, %c0_i32_0 : i32, i32
  }
  func.func @transform_2(%arg0: i32) -> (i32, i32) {
    %c0_i32 = arith.constant 0 : i32
    %c0_i32_0 = arith.constant 0 : i32
    return %arg0, %c0_i32 : i32, i32
  }
}

</mosaic_0001>

<llo_original>
// kernel: tpu_custom_call.1
$region0: #{tpu_custom_call.1}
  #allocation0 [shape = 'u32[]', space=smem, size = 0x4, offset = 0x4, fixed_abs, tag = 'smem constant byte address 0x4 - core index']
  #allocation1 [shape = 'u32[144,128]{1,0:T(1,128)}', space=vmem, size = 0x12000, scoped, tag = 'internal scratch']
  %s0 = inlined_call_operand.hbm [shape: f32[1024,128], index: 0, kind: input, shape index: {}]
  %s1 = inlined_call_operand.vmem [shape: f32[128,1], index: 1, kind: input, shape index: {}]
  %s2 = inlined_call_operand.vmem [shape: f32[1024,1], index: 2, kind: output, shape index: {}]
  %s3 = sld [smem:[#allocation0]]
  $region22: #{tpu_custom_call.1} parent=0
    _
  %s5 = ssub.s32 1, %s3
  %s6 = scalar_select 0, %s5, %s3
  $region1: #{tpu_custom_call.1} parent=0
    #allocation2 [shape = 'u8[524288]{0}', space=vmem, size = 0x80000, scoped, tag = 'input window, operand 0, single buffered']
    #allocation3 [shape = 's32[1]{0}', space=sflag, size = 0x4, scoped, tag = 'scoped memory for tpu_custom_call.1']
    %7 = vsyncpa [#allocation3], 0
    // Predicated region
    $region2: #{tpu_custom_call.1} parent=1 // pred_check
      _
    $region3: #{tpu_custom_call.1} parent=1 // pred_check_branch
      %9 = sbr.rel (0) target = $region5
    $region4: #{tpu_custom_call.1} parent=1 // pred_region
      %s11 = ssub.s32 16384, 16384
      %12 = vsyncadd [#allocation3], %s11
      %s13 = sshll.u32 [#allocation2], 4
      %s14 = int_to_ptr.vmem [resolvable:$true] %s13
      %19 = dma.hbm_to_vmem [thread:$0]  %s0, 16384, %s14, [#allocation3], 128, 128, 8
    $region5: #{tpu_custom_call.1} parent=1 // pred_fallthru
      _
    // Predicated region
    $region6: #{tpu_custom_call.1} parent=1 // pred_check
      _
    $region7: #{tpu_custom_call.1} parent=1 // pred_check_branch
      %21 = sbr.rel (0) target = $region9
    $region8: #{tpu_custom_call.1} parent=1 // pred_region
      _
    $region9: #{tpu_custom_call.1} parent=1 // pred_fallthru
      _
    // Predicated region
    $region10: #{tpu_custom_call.1} parent=1 // pred_check
      _
    $region11: #{tpu_custom_call.1} parent=1 // pred_check_branch
      %23 = sbr.rel (0) target = $region13
    $region12: #{tpu_custom_call.1} parent=1 // pred_region
      %24 = dma.done [#allocation3], 16384
    $region13: #{tpu_custom_call.1} parent=1 // pred_fallthru
      _
    %v25 = vld [vmem:[#allocation2] sm:$0xff]
    %v26 = vld [vmem:[#allocation2 + $0x8] sm:$0xff]
    %v27 = vld [vmem:[#allocation2 + $0x10] sm:$0xff]
    %v28 = vld [vmem:[#allocation2 + $0x18] sm:$0xff]
    %v29 = vld [vmem:[#allocation2 + $0x20] sm:$0xff]
    %v30 = vld [vmem:[#allocation2 + $0x28] sm:$0xff]
    %v31 = vld [vmem:[#allocation2 + $0x30] sm:$0xff]
    %v32 = vld [vmem:[#allocation2 + $0x38] sm:$0xff]
    %v33 = vld [vmem:[#allocation2 + $0x40] sm:$0xff]
    %v34 = vld [vmem:[#allocation2 + $0x48] sm:$0xff]
    %v35 = vld [vmem:[#allocation2 + $0x50] sm:$0xff]
    %v36 = vld [vmem:[#allocation2 + $0x58] sm:$0xff]
    %v37 = vld [vmem:[#allocation2 + $0x60] sm:$0xff]
    %v38 = vld [vmem:[#allocation2 + $0x68] sm:$0xff]
    %v39 = vld [vmem:[#allocation2 + $0x70] sm:$0xff]
    %v40 = vld [vmem:[#allocation2 + $0x78] sm:$0xff]
    %v41 = vld [vmem:[#allocation2 + $0x80] sm:$0xff]
    %v42 = vld [vmem:[#allocation2 + $0x88] sm:$0xff]
    %v43 = vld [vmem:[#allocation2 + $0x90] sm:$0xff]
    %v44 = vld [vmem:[#allocation2 + $0x98] sm:$0xff]
    %v45 = vld [vmem:[#allocation2 + $0xa0] sm:$0xff]
    %v46 = vld [vmem:[#allocation2 + $0xa8] sm:$0xff]
    %v47 = vld [vmem:[#allocation2 + $0xb0] sm:$0xff]
    %v48 = vld [vmem:[#allocation2 + $0xb8] sm:$0xff]
    %v49 = vld [vmem:[#allocation2 + $0xc0] sm:$0xff]
    %v50 = vld [vmem:[#allocation2 + $0xc8] sm:$0xff]
    %v51 = vld [vmem:[#allocation2 + $0xd0] sm:$0xff]
    %v52 = vld [vmem:[#allocation2 + $0xd8] sm:$0xff]
    %v53 = vld [vmem:[#allocation2 + $0xe0] sm:$0xff]
    %v54 = vld [vmem:[#allocation2 + $0xe8] sm:$0xff]
    %v55 = vld [vmem:[#allocation2 + $0xf0] sm:$0xff]
    %v56 = vld [vmem:[#allocation2 + $0xf8] sm:$0xff]
    %v57 = vld [vmem:[#allocation2 + $0x100] sm:$0xff]
    %v58 = vld [vmem:[#allocation2 + $0x108] sm:$0xff]
    %v59 = vld [vmem:[#allocation2 + $0x110] sm:$0xff]
    %v60 = vld [vmem:[#allocation2 + $0x118] sm:$0xff]
    %v61 = vld [vmem:[#allocation2 + $0x120] sm:$0xff]
    %v62 = vld [vmem:[#allocation2 + $0x128] sm:$0xff]
    %v63 = vld [vmem:[#allocation2 + $0x130] sm:$0xff]
    %v64 = vld [vmem:[#allocation2 + $0x138] sm:$0xff]
    %v65 = vld [vmem:[#allocation2 + $0x140] sm:$0xff]
    %v66 = vld [vmem:[#allocation2 + $0x148] sm:$0xff]
    %v67 = vld [vmem:[#allocation2 + $0x150] sm:$0xff]
    %v68 = vld [vmem:[#allocation2 + $0x158] sm:$0xff]
    %v69 = vld [vmem:[#allocation2 + $0x160] sm:$0xff]
    %v70 = vld [vmem:[#allocation2 + $0x168] sm:$0xff]
    %v71 = vld [vmem:[#allocation2 + $0x170] sm:$0xff]
    %v72 = vld [vmem:[#allocation2 + $0x178] sm:$0xff]
    %v73 = vld [vmem:[#allocation2 + $0x180] sm:$0xff]
    %v74 = vld [vmem:[#allocation2 + $0x188] sm:$0xff]
    %v75 = vld [vmem:[#allocation2 + $0x190] sm:$0xff]
    %v76 = vld [vmem:[#allocation2 + $0x198] sm:$0xff]
    %v77 = vld [vmem:[#allocation2 + $0x1a0] sm:$0xff]
    %v78 = vld [vmem:[#allocation2 + $0x1a8] sm:$0xff]
    %v79 = vld [vmem:[#allocation2 + $0x1b0] sm:$0xff]
    %v80 = vld [vmem:[#allocation2 + $0x1b8] sm:$0xff]
    %v81 = vld [vmem:[#allocation2 + $0x1c0] sm:$0xff]
    %v82 = vld [vmem:[#allocation2 + $0x1c8] sm:$0xff]
    %v83 = vld [vmem:[#allocation2 + $0x1d0] sm:$0xff]
    %v84 = vld [vmem:[#allocation2 + $0x1d8] sm:$0xff]
    %v85 = vld [vmem:[#allocation2 + $0x1e0] sm:$0xff]
    %v86 = vld [vmem:[#allocation2 + $0x1e8] sm:$0xff]
    %v87 = vld [vmem:[#allocation2 + $0x1f0] sm:$0xff]
    %v88 = vld [vmem:[#allocation2 + $0x1f8] sm:$0xff]
    %v89 = vld [vmem:[#allocation2 + $0x200] sm:$0xff]
    %v90 = vld [vmem:[#allocation2 + $0x208] sm:$0xff]
    %v91 = vld [vmem:[#allocation2 + $0x210] sm:$0xff]
    %v92 = vld [vmem:[#allocation2 + $0x218] sm:$0xff]
    %v93 = vld [vmem:[#allocation2 + $0x220] sm:$0xff]
    %v94 = vld [vmem:[#allocation2 + $0x228] sm:$0xff]
    %v95 = vld [vmem:[#allocation2 + $0x230] sm:$0xff]
    %v96 = vld [vmem:[#allocation2 + $0x238] sm:$0xff]
    %v97 = vld [vmem:[#allocation2 + $0x240] sm:$0xff]
    %v98 = vld [vmem:[#allocation2 + $0x248] sm:$0xff]
    %v99 = vld [vmem:[#allocation2 + $0x250] sm:$0xff]
    %v100 = vld [vmem:[#allocation2 + $0x258] sm:$0xff]
    %v101 = vld [vmem:[#allocation2 + $0x260] sm:$0xff]
    %v102 = vld [vmem:[#allocation2 + $0x268] sm:$0xff]
    %v103 = vld [vmem:[#allocation2 + $0x270] sm:$0xff]
    %v104 = vld [vmem:[#allocation2 + $0x278] sm:$0xff]
    %v105 = vld [vmem:[#allocation2 + $0x280] sm:$0xff]
    %v106 = vld [vmem:[#allocation2 + $0x288] sm:$0xff]
    %v107 = vld [vmem:[#allocation2 + $0x290] sm:$0xff]
    %v108 = vld [vmem:[#allocation2 + $0x298] sm:$0xff]
    %v109 = vld [vmem:[#allocation2 + $0x2a0] sm:$0xff]
    %v110 = vld [vmem:[#allocation2 + $0x2a8] sm:$0xff]
    %v111 = vld [vmem:[#allocation2 + $0x2b0] sm:$0xff]
    %v112 = vld [vmem:[#allocation2 + $0x2b8] sm:$0xff]
    %v113 = vld [vmem:[#allocation2 + $0x2c0] sm:$0xff]
    %v114 = vld [vmem:[#allocation2 + $0x2c8] sm:$0xff]
    %v115 = vld [vmem:[#allocation2 + $0x2d0] sm:$0xff]
    %v116 = vld [vmem:[#allocation2 + $0x2d8] sm:$0xff]
    %v117 = vld [vmem:[#allocation2 + $0x2e0] sm:$0xff]
    %v118 = vld [vmem:[#allocation2 + $0x2e8] sm:$0xff]
    %v119 = vld [vmem:[#allocation2 + $0x2f0] sm:$0xff]
    %v120 = vld [vmem:[#allocation2 + $0x2f8] sm:$0xff]
    %v121 = vld [vmem:[#allocation2 + $0x300] sm:$0xff]
    %v122 = vld [vmem:[#allocation2 + $0x308] sm:$0xff]
    %v123 = vld [vmem:[#allocation2 + $0x310] sm:$0xff]
    %v124 = vld [vmem:[#allocation2 + $0x318] sm:$0xff]
    %v125 = vld [vmem:[#allocation2 + $0x320] sm:$0xff]
    %v126 = vld [vmem:[#allocation2 + $0x328] sm:$0xff]
    %v127 = vld [vmem:[#allocation2 + $0x330] sm:$0xff]
    %v128 = vld [vmem:[#allocation2 + $0x338] sm:$0xff]
    %v129 = vld [vmem:[#allocation2 + $0x340] sm:$0xff]
    %v130 = vld [vmem:[#allocation2 + $0x348] sm:$0xff]
    %v131 = vld [vmem:[#allocation2 + $0x350] sm:$0xff]
    %v132 = vld [vmem:[#allocation2 + $0x358] sm:$0xff]
    %v133 = vld [vmem:[#allocation2 + $0x360] sm:$0xff]
    %v134 = vld [vmem:[#allocation2 + $0x368] sm:$0xff]
    %v135 = vld [vmem:[#allocation2 + $0x370] sm:$0xff]
    %v136 = vld [vmem:[#allocation2 + $0x378] sm:$0xff]
    %v137 = vld [vmem:[#allocation2 + $0x380] sm:$0xff]
    %v138 = vld [vmem:[#allocation2 + $0x388] sm:$0xff]
    %v139 = vld [vmem:[#allocation2 + $0x390] sm:$0xff]
    %v140 = vld [vmem:[#allocation2 + $0x398] sm:$0xff]
    %v141 = vld [vmem:[#allocation2 + $0x3a0] sm:$0xff]
    %v142 = vld [vmem:[#allocation2 + $0x3a8] sm:$0xff]
    %v143 = vld [vmem:[#allocation2 + $0x3b0] sm:$0xff]
    %v144 = vld [vmem:[#allocation2 + $0x3b8] sm:$0xff]
    %v145 = vld [vmem:[#allocation2 + $0x3c0] sm:$0xff]
    %v146 = vld [vmem:[#allocation2 + $0x3c8] sm:$0xff]
    %v147 = vld [vmem:[#allocation2 + $0x3d0] sm:$0xff]
    %v148 = vld [vmem:[#allocation2 + $0x3d8] sm:$0xff]
    %v149 = vld [vmem:[#allocation2 + $0x3e0] sm:$0xff]
    %v150 = vld [vmem:[#allocation2 + $0x3e8] sm:$0xff]
    %v151 = vld [vmem:[#allocation2 + $0x3f0] sm:$0xff]
    %v152 = vld [vmem:[#allocation2 + $0x3f8] sm:$0xff]
    %v153 = vld [vmem:[%s1] sm:$0xff]
    %v154 = vld [vmem:[%s1 + $0x8] sm:$0xff]
    %v155 = vld [vmem:[%s1 + $0x10] sm:$0xff]
    %v156 = vld [vmem:[%s1 + $0x18] sm:$0xff]
    %v157 = vld [vmem:[%s1 + $0x20] sm:$0xff]
    %v158 = vld [vmem:[%s1 + $0x28] sm:$0xff]
    %v159 = vld [vmem:[%s1 + $0x30] sm:$0xff]
    %v160 = vld [vmem:[%s1 + $0x38] sm:$0xff]
    %v161 = vld [vmem:[%s1 + $0x40] sm:$0xff]
    %v162 = vld [vmem:[%s1 + $0x48] sm:$0xff]
    %v163 = vld [vmem:[%s1 + $0x50] sm:$0xff]
    %v164 = vld [vmem:[%s1 + $0x58] sm:$0xff]
    %v165 = vld [vmem:[%s1 + $0x60] sm:$0xff]
    %v166 = vld [vmem:[%s1 + $0x68] sm:$0xff]
    %v167 = vld [vmem:[%s1 + $0x70] sm:$0xff]
    %v168 = vld [vmem:[%s1 + $0x78] sm:$0xff]
    %169 = vmatprep.subr.mxu0 0.0
    %170 = vmatpush1.msra.mxu0 %v153
    %171 = vmatprep.subr.mxu0 0.0
    %172 = vmatpush1.msra.mxu0 %v154
    %173 = vmatprep.subr.mxu0 0.0
    %174 = vmatpush1.msra.mxu0 %v155
    %175 = vmatprep.subr.mxu0 0.0
    %176 = vmatpush1.msra.mxu0 %v156
    %177 = vmatprep.subr.mxu0 0.0
    %178 = vmatpush1.msra.mxu0 %v157
    %179 = vmatprep.subr.mxu0 0.0
    %180 = vmatpush1.msra.mxu0 %v158
    %181 = vmatprep.subr.mxu0 0.0
    %182 = vmatpush1.msra.mxu0 %v159
    %183 = vmatprep.subr.mxu0 0.0
    %184 = vmatpush1.msra.mxu0 %v160
    %185 = vmatprep.subr.mxu0 0.0
    %186 = vmatpush1.msra.mxu0 %v161
    %187 = vmatprep.subr.mxu0 0.0
    %188 = vmatpush1.msra.mxu0 %v162
    %189 = vmatprep.subr.mxu0 0.0
    %190 = vmatpush1.msra.mxu0 %v163
    %191 = vmatprep.subr.mxu0 0.0
    %192 = vmatpush1.msra.mxu0 %v164
    %193 = vmatprep.subr.mxu0 0.0
    %194 = vmatpush1.msra.mxu0 %v165
    %195 = vmatprep.subr.mxu0 0.0
    %196 = vmatpush1.msra.mxu0 %v166
    %197 = vmatprep.subr.mxu0 0.0
    %198 = vmatpush1.msra.mxu0 %v167
    %199 = vmatprep.subr.mxu0 0.0
    %200 = vmatpush1.msra.mxu0 %v168
    %201 = vmatprep.subr.mxu0 0.0
    %202 = vmatpush1.msra.mxu0 0.0
    %203 = vmatprep.subr.mxu0 0.0
    %204 = vmatpush1.msra.mxu0 0.0
    %205 = vmatprep.subr.mxu0 0.0
    %206 = vmatpush1.msra.mxu0 0.0
    %207 = vmatprep.subr.mxu0 0.0
    %208 = vmatpush1.msra.mxu0 0.0
    %209 = vmatprep.subr.mxu0 0.0
    %210 = vmatpush1.msra.mxu0 0.0
    %211 = vmatprep.subr.mxu0 0.0
    %212 = vmatpush1.msra.mxu0 0.0
    %213 = vmatprep.subr.mxu0 0.0
    %214 = vmatpush1.msra.mxu0 0.0
    %215 = vmatprep.subr.mxu0 0.0
    %216 = vmatpush1.msra.mxu0 0.0
    %217 = vmatprep.subr.mxu0 0.0
    %218 = vmatpush1.msra.mxu0 0.0
    %219 = vmatprep.subr.mxu0 0.0
    %220 = vmatpush1.msra.mxu0 0.0
    %221 = vmatprep.subr.mxu0 0.0
    %222 = vmatpush1.msra.mxu0 0.0
    %223 = vmatprep.subr.mxu0 0.0
    %224 = vmatpush1.msra.mxu0 0.0
    %225 = vmatprep.subr.mxu0 0.0
    %226 = vmatpush1.msra.mxu0 0.0
    %227 = vmatprep.subr.mxu0 0.0
    %228 = vmatpush1.msra.mxu0 0.0
    %229 = vmatprep.subr.mxu0 0.0
    %230 = vmatpush1.msra.mxu0 0.0
    %231 = vmatprep.subr.mxu0 0.0
    %232 = vmatpush1.msra.mxu0 0.0
    %233 = vmatprep.mubr.f32.mxu0 0.0
    %234 = vmatmul.mubr.f32.gmra.mrb[0].mxu0 %v25
    %v235 = vpop.f32.mrb[0].mxu0
    %v236 = vadd.f32 0.0, %v235
    %v237 = vpop.f32.mrb[0].mxu0
    %238 = vmatprep.mubr.f32.mxu0 0.0
    %239 = vmatmul.mubr.f32.gmra.mrb[0].mxu0 %v26
    %v240 = vpop.f32.mrb[0].mxu0
    %v241 = vadd.f32 0.0, %v240
    %v242 = vpop.f32.mrb[0].mxu0
    %243 = vmatprep.mubr.f32.mxu0 0.0
    %244 = vmatmul.mubr.f32.gmra.mrb[0].mxu0 %v27
    %v245 = vpop.f32.mrb[0].mxu0
    %v246 = vadd.f32 0.0, %v245
    %v247 = vpop.f32.mrb[0].mxu0
    %248 = vmatprep.mubr.f32.mxu0 0.0
    %249 = vmatmul.mubr.f32.gmra.mrb[0].mxu0 %v28
    %v250 = vpop.f32.mrb[0].mxu0
    %v251 = vadd.f32 0.0, %v250
    %v252 = vpop.f32.mrb[0].mxu0
    %253 = vmatprep.mubr.f32.mxu0 0.0
    %254 = vmatmul.mubr.f32.gmra.mrb[0].mxu0 %v29
    %v255 = vpop.f32.mrb[0].mxu0
    %v256 = vadd.f32 0.0, %v255
    %v257 = vpop.f32.mrb[0].mxu0
    %258 = vmatprep.mubr.f32.mxu0 0.0
    %259 = vmatmul.mubr.f32.gmra.mrb[0].mxu0 %v30
    %v260 = vpop.f32.mrb[0].mxu0
    %v261 = vadd.f32 0.0, %v260
    %v262 = vpop.f32.mrb[0].mxu0
    %263 = vmatprep.mubr.f32.mxu0 0.0
    %264 = vmatmul.mubr.f32.gmra.mrb[0].mxu0 %v31
    %v265 = vpop.f32.mrb[0].mxu0
    %v266 = vadd.f32 0.0, %v265
    %v267 = vpop.f32.mrb[0].mxu0
    %268 = vmatprep.mubr.f32.mxu0 0.0
    %269 = vmatmul.mubr.f32.gmra.mrb[0].mxu0 %v32
    %v270 = vpop.f32.mrb[0].mxu0
    %v271 = vadd.f32 0.0, %v270
    %v272 = vpop.f32.mrb[0].mxu0
    %273 = vmatprep.mubr.f32.mxu0 0.0
    %274 = vmatmul.mubr.f32.gmra.mrb[0].mxu0 %v33
    %v275 = vpop.f32.mrb[0].mxu0
    %v276 = vadd.f32 0.0, %v275
    %v277 = vpop.f32.mrb[0].mxu0
    %278 = vmatprep.mubr.f32.mxu0 0.0
    %279 = vmatmul.mubr.f32.gmra.mrb[0].mxu0 %v34
    %v280 = vpop.f32.mrb[0].mxu0
    %v281 = vadd.f32 0.0, %v280
    %v282 = vpop.f32.mrb[0].mxu0
    %283 = vmatprep.mubr.f32.mxu0 0.0
    %284 = vmatmul.mubr.f32.gmra.mrb[0].mxu0 %v35
    %v285 = vpop.f32.mrb[0].mxu0
    %v286 = vadd.f32 0.0, %v285
    %v287 = vpop.f32.mrb[0].mxu0
    %288 = vmatprep.mubr.f32.mxu0 0.0
    %289 = vmatmul.mubr.f32.gmra.mrb[0].mxu0 %v36
    %v290 = vpop.f32.mrb[0].mxu0
    %v291 = vadd.f32 0.0, %v290
    %v292 = vpop.f32.mrb[0].mxu0
    %293 = vmatprep.mubr.f32.mxu0 0.0
    %294 = vmatmul.mubr.f32.gmra.mrb[0].mxu0 %v37
    %v295 = vpop.f32.mrb[0].mxu0
    %v296 = vadd.f32 0.0, %v295
    %v297 = vpop.f32.mrb[0].mxu0
    %298 = vmatprep.mubr.f32.mxu0 0.0
    %299 = vmatmul.mubr.f32.gmra.mrb[0].mxu0 %v38
    %v300 = vpop.f32.mrb[0].mxu0
    %v301 = vadd.f32 0.0, %v300
    %v302 = vpop.f32.mrb[0].mxu0
    %303 = vmatprep.mubr.f32.mxu0 0.0
    %304 = vmatmul.mubr.f32.gmra.mrb[0].mxu0 %v39
    %v305 = vpop.f32.mrb[0].mxu0
    %v306 = vadd.f32 0.0, %v305
    %v307 = vpop.f32.mrb[0].mxu0
    %308 = vmatprep.mubr.f32.mxu0 0.0
    %309 = vmatmul.mubr.f32.gmra.mrb[0].mxu0 %v40
    %v310 = vpop.f32.mrb[0].mxu0
    %v311 = vadd.f32 0.0, %v310
    %v312 = vpop.f32.mrb[0].mxu0
    %313 = vmatprep.mubr.f32.mxu0 0.0
    %314 = vmatmul.mubr.f32.gmra.mrb[0].mxu0 %v41
    %v315 = vpop.f32.mrb[0].mxu0
    %v316 = vadd.f32 0.0, %v315
    %v317 = vpop.f32.mrb[0].mxu0
    %318 = vmatprep.mubr.f32.mxu0 0.0
    %319 = vmatmul.mubr.f32.gmra.mrb[0].mxu0 %v42
    %v320 = vpop.f32.mrb[0].mxu0
    %v321 = vadd.f32 0.0, %v320
    %v322 = vpop.f32.mrb[0].mxu0
    %323 = vmatprep.mubr.f32.mxu0 0.0
    %324 = vmatmul.mubr.f32.gmra.mrb[0].mxu0 %v43
    %v325 = vpop.f32.mrb[0].mxu0
    %v326 = vadd.f32 0.0, %v325
    %v327 = vpop.f32.mrb[0].mxu0
    %328 = vmatprep.mubr.f32.mxu0 0.0
    %329 = vmatmul.mubr.f32.gmra.mrb[0].mxu0 %v44
    %v330 = vpop.f32.mrb[0].mxu0
    %v331 = vadd.f32 0.0, %v330
    %v332 = vpop.f32.mrb[0].mxu0
    %333 = vmatprep.mubr.f32.mxu0 0.0
    %334 = vmatmul.mubr.f32.gmra.mrb[0].mxu0 %v45
    %v335 = vpop.f32.mrb[0].mxu0
    %v336 = vadd.f32 0.0, %v335
    %v337 = vpop.f32.mrb[0].mxu0
    %338 = vmatprep.mubr.f32.mxu0 0.0
    %339 = vmatmul.mubr.f32.gmra.mrb[0].mxu0 %v46
    %v340 = vpop.f32.mrb[0].mxu0
    %v341 = vadd.f32 0.0, %v340
    %v342 = vpop.f32.mrb[0].mxu0
    %343 = vmatprep.mubr.f32.mxu0 0.0
    %344 = vmatmul.mubr.f32.gmra.mrb[0].mxu0 %v47
    %v345 = vpop.f32.mrb[0].mxu0
    %v346 = vadd.f32 0.0, %v345
    %v347 = vpop.f32.mrb[0].mxu0
    %348 = vmatprep.mubr.f32.mxu0 0.0
    %349 = vmatmul.mubr.f32.gmra.mrb[0].mxu0 %v48
    %v350 = vpop.f32.mrb[0].mxu0
    %v351 = vadd.f32 0.0, %v350
    %v352 = vpop.f32.mrb[0].mxu0
    %353 = vmatprep.mubr.f32.mxu0 0.0
    %354 = vmatmul.mubr.f32.gmra.mrb[0].mxu0 %v49
    %v355 = vpop.f32.mrb[0].mxu0
    %v356 = vadd.f32 0.0, %v355
    %v357 = vpop.f32.mrb[0].mxu0
    %358 = vmatprep.mubr.f32.mxu0 0.0
    %359 = vmatmul.mubr.f32.gmra.mrb[0].mxu0 %v50
    %v360 = vpop.f32.mrb[0].mxu0
    %v361 = vadd.f32 0.0, %v360
    %v362 = vpop.f32.mrb[0].mxu0
    %363 = vmatprep.mubr.f32.mxu0 0.0
    %364 = vmatmul.mubr.f32.gmra.mrb[0].mxu0 %v51
    %v365 = vpop.f32.mrb[0].mxu0
    %v366 = vadd.f32 0.0, %v365
    %v367 = vpop.f32.mrb[0].mxu0
    %368 = vmatprep.mubr.f32.mxu0 0.0
    %369 = vmatmul.mubr.f32.gmra.mrb[0].mxu0 %v52
    %v370 = vpop.f32.mrb[0].mxu0
    %v371 = vadd.f32 0.0, %v370
    %v372 = vpop.f32.mrb[0].mxu0
    %373 = vmatprep.mubr.f32.mxu0 0.0
    %374 = vmatmul.mubr.f32.gmra.mrb[0].mxu0 %v53
    %v375 = vpop.f32.mrb[0].mxu0
    %v376 = vadd.f32 0.0, %v375
    %v377 = vpop.f32.mrb[0].mxu0
    %378 = vmatprep.mubr.f32.mxu0 0.0
    %379 = vmatmul.mubr.f32.gmra.mrb[0].mxu0 %v54
    %v380 = vpop.f32.mrb[0].mxu0
    %v381 = vadd.f32 0.0, %v380
    %v382 = vpop.f32.mrb[0].mxu0
    %383 = vmatprep.mubr.f32.mxu0 0.0
    %384 = vmatmul.mubr.f32.gmra.mrb[0].mxu0 %v55
    %v385 = vpop.f32.mrb[0].mxu0
    %v386 = vadd.f32 0.0, %v385
    %v387 = vpop.f32.mrb[0].mxu0
    %388 = vmatprep.mubr.f32.mxu0 0.0
    %389 = vmatmul.mubr.f32.gmra.mrb[0].mxu0 %v56
    %v390 = vpop.f32.mrb[0].mxu0
    %v391 = vadd.f32 0.0, %v390
    %v392 = vpop.f32.mrb[0].mxu0
    %393 = vmatprep.mubr.f32.mxu0 0.0
    %394 = vmatmul.mubr.f32.gmra.mrb[0].mxu0 %v57
    %v395 = vpop.f32.mrb[0].mxu0
    %v396 = vadd.f32 0.0, %v395
    %v397 = vpop.f32.mrb[0].mxu0
    %398 = vmatprep.mubr.f32.mxu0 0.0
    %399 = vmatmul.mubr.f32.gmra.mrb[0].mxu0 %v58
    %v400 = vpop.f32.mrb[0].mxu0
    %v401 = vadd.f32 0.0, %v400
    %v402 = vpop.f32.mrb[0].mxu0
    %403 = vmatprep.mubr.f32.mxu0 0.0
    %404 = vmatmul.mubr.f32.gmra.mrb[0].mxu0 %v59
    %v405 = vpop.f32.mrb[0].mxu0
    %v406 = vadd.f32 0.0, %v405
    %v407 = vpop.f32.mrb[0].mxu0
    %408 = vmatprep.mubr.f32.mxu0 0.0
    %409 = vmatmul.mubr.f32.gmra.mrb[0].mxu0 %v60
    %v410 = vpop.f32.mrb[0].mxu0
    %v411 = vadd.f32 0.0, %v410
    %v412 = vpop.f32.mrb[0].mxu0
    %413 = vmatprep.mubr.f32.mxu0 0.0
    %414 = vmatmul.mubr.f32.gmra.mrb[0].mxu0 %v61
    %v415 = vpop.f32.mrb[0].mxu0
    %v416 = vadd.f32 0.0, %v415
    %v417 = vpop.f32.mrb[0].mxu0
    %418 = vmatprep.mubr.f32.mxu0 0.0
    %419 = vmatmul.mubr.f32.gmra.mrb[0].mxu0 %v62
    %v420 = vpop.f32.mrb[0].mxu0
    %v421 = vadd.f32 0.0, %v420
    %v422 = vpop.f32.mrb[0].mxu0
    %423 = vmatprep.mubr.f32.mxu0 0.0
    %424 = vmatmul.mubr.f32.gmra.mrb[0].mxu0 %v63
    %v425 = vpop.f32.mrb[0].mxu0
    %v426 = vadd.f32 0.0, %v425
    %v427 = vpop.f32.mrb[0].mxu0
    %428 = vmatprep.mubr.f32.mxu0 0.0
    %429 = vmatmul.mubr.f32.gmra.mrb[0].mxu0 %v64
    %v430 = vpop.f32.mrb[0].mxu0
    %v431 = vadd.f32 0.0, %v430
    %v432 = vpop.f32.mrb[0].mxu0
    %433 = vmatprep.mubr.f32.mxu0 0.0
    %434 = vmatmul.mubr.f32.gmra.mrb[0].mxu0 %v65
    %v435 = vpop.f32.mrb[0].mxu0
    %v436 = vadd.f32 0.0, %v435
    %v437 = vpop.f32.mrb[0].mxu0
    %438 = vmatprep.mubr.f32.mxu0 0.0
    %439 = vmatmul.mubr.f32.gmra.mrb[0].mxu0 %v66
    %v440 = vpop.f32.mrb[0].mxu0
    %v441 = vadd.f32 0.0, %v440
    %v442 = vpop.f32.mrb[0].mxu0
    %443 = vmatprep.mubr.f32.mxu0 0.0
    %444 = vmatmul.mubr.f32.gmra.mrb[0].mxu0 %v67
    %v445 = vpop.f32.mrb[0].mxu0
    %v446 = vadd.f32 0.0, %v445
    %v447 = vpop.f32.mrb[0].mxu0
    %448 = vmatprep.mubr.f32.mxu0 0.0
    %449 = vmatmul.mubr.f32.gmra.mrb[0].mxu0 %v68
    %v450 = vpop.f32.mrb[0].mxu0
    %v451 = vadd.f32 0.0, %v450
    %v452 = vpop.f32.mrb[0].mxu0
    %453 = vmatprep.mubr.f32.mxu0 0.0
    %454 = vmatmul.mubr.f32.gmra.mrb[0].mxu0 %v69
    %v455 = vpop.f32.mrb[0].mxu0
    %v456 = vadd.f32 0.0, %v455
    %v457 = vpop.f32.mrb[0].mxu0
    %458 = vmatprep.mubr.f32.mxu0 0.0
    %459 = vmatmul.mubr.f32.gmra.mrb[0].mxu0 %v70
    %v460 = vpop.f32.mrb[0].mxu0
    %v461 = vadd.f32 0.0, %v460
    %v462 = vpop.f32.mrb[0].mxu0
    %463 = vmatprep.mubr.f32.mxu0 0.0
    %464 = vmatmul.mubr.f32.gmra.mrb[0].mxu0 %v71
    %v465 = vpop.f32.mrb[0].mxu0
    %v466 = vadd.f32 0.0, %v465
    %v467 = vpop.f32.mrb[0].mxu0
    %468 = vmatprep.mubr.f32.mxu0 0.0
    %469 = vmatmul.mubr.f32.gmra.mrb[0].mxu0 %v72
    %v470 = vpop.f32.mrb[0].mxu0
    %v471 = vadd.f32 0.0, %v470
    %v472 = vpop.f32.mrb[0].mxu0
    %473 = vmatprep.mubr.f32.mxu0 0.0
    %474 = vmatmul.mubr.f32.gmra.mrb[0].mxu0 %v73
    %v475 = vpop.f32.mrb[0].mxu0
    %v476 = vadd.f32 0.0, %v475
    %v477 = vpop.f32.mrb[0].mxu0
    %478 = vmatprep.mubr.f32.mxu0 0.0
    %479 = vmatmul.mubr.f32.gmra.mrb[0].mxu0 %v74
    %v480 = vpop.f32.mrb[0].mxu0
    %v481 = vadd.f32 0.0, %v480
    %v482 = vpop.f32.mrb[0].mxu0
    %483 = vmatprep.mubr.f32.mxu0 0.0
    %484 = vmatmul.mubr.f32.gmra.mrb[0].mxu0 %v75
    %v485 = vpop.f32.mrb[0].mxu0
    %v486 = vadd.f32 0.0, %v485
    %v487 = vpop.f32.mrb[0].mxu0
    %488 = vmatprep.mubr.f32.mxu0 0.0
    %489 = vmatmul.mubr.f32.gmra.mrb[0].mxu0 %v76
    %v490 = vpop.f32.mrb[0].mxu0
    %v491 = vadd.f32 0.0, %v490
    %v492 = vpop.f32.mrb[0].mxu0
    %493 = vmatprep.mubr.f32.mxu0 0.0
    %494 = vmatmul.mubr.f32.gmra.mrb[0].mxu0 %v77
    %v495 = vpop.f32.mrb[0].mxu0
    %v496 = vadd.f32 0.0, %v495
    %v497 = vpop.f32.mrb[0].mxu0
    %498 = vmatprep.mubr.f32.mxu0 0.0
    %499 = vmatmul.mubr.f32.gmra.mrb[0].mxu0 %v78
    %v500 = vpop.f32.mrb[0].mxu0
    %v501 = vadd.f32 0.0, %v500
    %v502 = vpop.f32.mrb[0].mxu0
    %503 = vmatprep.mubr.f32.mxu0 0.0
    %504 = vmatmul.mubr.f32.gmra.mrb[0].mxu0 %v79
    %v505 = vpop.f32.mrb[0].mxu0
    %v506 = vadd.f32 0.0, %v505
    %v507 = vpop.f32.mrb[0].mxu0
    %508 = vmatprep.mubr.f32.mxu0 0.0
    %509 = vmatmul.mubr.f32.gmra.mrb[0].mxu0 %v80
    %v510 = vpop.f32.mrb[0].mxu0
    %v511 = vadd.f32 0.0, %v510
    %v512 = vpop.f32.mrb[0].mxu0
    %513 = vmatprep.mubr.f32.mxu0 0.0
    %514 = vmatmul.mubr.f32.gmra.mrb[0].mxu0 %v81
    %v515 = vpop.f32.mrb[0].mxu0
    %v516 = vadd.f32 0.0, %v515
    %v517 = vpop.f32.mrb[0].mxu0
    %518 = vmatprep.mubr.f32.mxu0 0.0
    %519 = vmatmul.mubr.f32.gmra.mrb[0].mxu0 %v82
    %v520 = vpop.f32.mrb[0].mxu0
    %v521 = vadd.f32 0.0, %v520
    %v522 = vpop.f32.mrb[0].mxu0
    %523 = vmatprep.mubr.f32.mxu0 0.0
    %524 = vmatmul.mubr.f32.gmra.mrb[0].mxu0 %v83
    %v525 = vpop.f32.mrb[0].mxu0
    %v526 = vadd.f32 0.0, %v525
    %v527 = vpop.f32.mrb[0].mxu0
    %528 = vmatprep.mubr.f32.mxu0 0.0
    %529 = vmatmul.mubr.f32.gmra.mrb[0].mxu0 %v84
    %v530 = vpop.f32.mrb[0].mxu0
    %v531 = vadd.f32 0.0, %v530
    %v532 = vpop.f32.mrb[0].mxu0
    %533 = vmatprep.mubr.f32.mxu0 0.0
    %534 = vmatmul.mubr.f32.gmra.mrb[0].mxu0 %v85
    %v535 = vpop.f32.mrb[0].mxu0
    %v536 = vadd.f32 0.0, %v535
    %v537 = vpop.f32.mrb[0].mxu0
    %538 = vmatprep.mubr.f32.mxu0 0.0
    %539 = vmatmul.mubr.f32.gmra.mrb[0].mxu0 %v86
    %v540 = vpop.f32.mrb[0].mxu0
    %v541 = vadd.f32 0.0, %v540
    %v542 = vpop.f32.mrb[0].mxu0
    %543 = vmatprep.mubr.f32.mxu0 0.0
    %544 = vmatmul.mubr.f32.gmra.mrb[0].mxu0 %v87
    %v545 = vpop.f32.mrb[0].mxu0
    %v546 = vadd.f32 0.0, %v545
    %v547 = vpop.f32.mrb[0].mxu0
    %548 = vmatprep.mubr.f32.mxu0 0.0
    %549 = vmatmul.mubr.f32.gmra.mrb[0].mxu0 %v88
    %v550 = vpop.f32.mrb[0].mxu0
    %v551 = vadd.f32 0.0, %v550
    %v552 = vpop.f32.mrb[0].mxu0
    %553 = vmatprep.mubr.f32.mxu0 0.0
    %554 = vmatmul.mubr.f32.gmra.mrb[0].mxu0 %v89
    %v555 = vpop.f32.mrb[0].mxu0
    %v556 = vadd.f32 0.0, %v555
    %v557 = vpop.f32.mrb[0].mxu0
    %558 = vmatprep.mubr.f32.mxu0 0.0
    %559 = vmatmul.mubr.f32.gmra.mrb[0].mxu0 %v90
    %v560 = vpop.f32.mrb[0].mxu0
    %v561 = vadd.f32 0.0, %v560
    %v562 = vpop.f32.mrb[0].mxu0
    %563 = vmatprep.mubr.f32.mxu0 0.0
    %564 = vmatmul.mubr.f32.gmra.mrb[0].mxu0 %v91
    %v565 = vpop.f32.mrb[0].mxu0
    %v566 = vadd.f32 0.0, %v565
    %v567 = vpop.f32.mrb[0].mxu0
    %568 = vmatprep.mubr.f32.mxu0 0.0
    %569 = vmatmul.mubr.f32.gmra.mrb[0].mxu0 %v92
    %v570 = vpop.f32.mrb[0].mxu0
    %v571 = vadd.f32 0.0, %v570
    %v572 = vpop.f32.mrb[0].mxu0
    %573 = vmatprep.mubr.f32.mxu0 0.0
    %574 = vmatmul.mubr.f32.gmra.mrb[0].mxu0 %v93
    %v575 = vpop.f32.mrb[0].mxu0
    %v576 = vadd.f32 0.0, %v575
    %v577 = vpop.f32.mrb[0].mxu0
    %578 = vmatprep.mubr.f32.mxu0 0.0
    %579 = vmatmul.mubr.f32.gmra.mrb[0].mxu0 %v94
    %v580 = vpop.f32.mrb[0].mxu0
    %v581 = vadd.f32 0.0, %v580
    %v582 = vpop.f32.mrb[0].mxu0
    %583 = vmatprep.mubr.f32.mxu0 0.0
    %584 = vmatmul.mubr.f32.gmra.mrb[0].mxu0 %v95
    %v585 = vpop.f32.mrb[0].mxu0
    %v586 = vadd.f32 0.0, %v585
    %v587 = vpop.f32.mrb[0].mxu0
    %588 = vmatprep.mubr.f32.mxu0 0.0
    %589 = vmatmul.mubr.f32.gmra.mrb[0].mxu0 %v96
    %v590 = vpop.f32.mrb[0].mxu0
    %v591 = vadd.f32 0.0, %v590
    %v592 = vpop.f32.mrb[0].mxu0
    %593 = vmatprep.mubr.f32.mxu0 0.0
    %594 = vmatmul.mubr.f32.gmra.mrb[0].mxu0 %v97
    %v595 = vpop.f32.mrb[0].mxu0
    %v596 = vadd.f32 0.0, %v595
    %v597 = vpop.f32.mrb[0].mxu0
    %598 = vmatprep.mubr.f32.mxu0 0.0
    %599 = vmatmul.mubr.f32.gmra.mrb[0].mxu0 %v98
    %v600 = vpop.f32.mrb[0].mxu0
    %v601 = vadd.f32 0.0, %v600
    %v602 = vpop.f32.mrb[0].mxu0
    %603 = vmatprep.mubr.f32.mxu0 0.0
    %604 = vmatmul.mubr.f32.gmra.mrb[0].mxu0 %v99
    %v605 = vpop.f32.mrb[0].mxu0
    %v606 = vadd.f32 0.0, %v605
    %v607 = vpop.f32.mrb[0].mxu0
    %608 = vmatprep.mubr.f32.mxu0 0.0
    %609 = vmatmul.mubr.f32.gmra.mrb[0].mxu0 %v100
    %v610 = vpop.f32.mrb[0].mxu0
    %v611 = vadd.f32 0.0, %v610
    %v612 = vpop.f32.mrb[0].mxu0
    %613 = vmatprep.mubr.f32.mxu0 0.0
    %614 = vmatmul.mubr.f32.gmra.mrb[0].mxu0 %v101
    %v615 = vpop.f32.mrb[0].mxu0
    %v616 = vadd.f32 0.0, %v615
    %v617 = vpop.f32.mrb[0].mxu0
    %618 = vmatprep.mubr.f32.mxu0 0.0
    %619 = vmatmul.mubr.f32.gmra.mrb[0].mxu0 %v102
    %v620 = vpop.f32.mrb[0].mxu0
    %v621 = vadd.f32 0.0, %v620
    %v622 = vpop.f32.mrb[0].mxu0
    %623 = vmatprep.mubr.f32.mxu0 0.0
    %624 = vmatmul.mubr.f32.gmra.mrb[0].mxu0 %v103
    %v625 = vpop.f32.mrb[0].mxu0
    %v626 = vadd.f32 0.0, %v625
    %v627 = vpop.f32.mrb[0].mxu0
    %628 = vmatprep.mubr.f32.mxu0 0.0
    %629 = vmatmul.mubr.f32.gmra.mrb[0].mxu0 %v104
    %v630 = vpop.f32.mrb[0].mxu0
    %v631 = vadd.f32 0.0, %v630
    %v632 = vpop.f32.mrb[0].mxu0
    %633 = vmatprep.mubr.f32.mxu0 0.0
    %634 = vmatmul.mubr.f32.gmra.mrb[0].mxu0 %v105
    %v635 = vpop.f32.mrb[0].mxu0
    %v636 = vadd.f32 0.0, %v635
    %v637 = vpop.f32.mrb[0].mxu0
    %638 = vmatprep.mubr.f32.mxu0 0.0
    %639 = vmatmul.mubr.f32.gmra.mrb[0].mxu0 %v106
    %v640 = vpop.f32.mrb[0].mxu0
    %v641 = vadd.f32 0.0, %v640
    %v642 = vpop.f32.mrb[0].mxu0
    %643 = vmatprep.mubr.f32.mxu0 0.0
    %644 = vmatmul.mubr.f32.gmra.mrb[0].mxu0 %v107
    %v645 = vpop.f32.mrb[0].mxu0
    %v646 = vadd.f32 0.0, %v645
    %v647 = vpop.f32.mrb[0].mxu0
    %648 = vmatprep.mubr.f32.mxu0 0.0
    %649 = vmatmul.mubr.f32.gmra.mrb[0].mxu0 %v108
    %v650 = vpop.f32.mrb[0].mxu0
    %v651 = vadd.f32 0.0, %v650
    %v652 = vpop.f32.mrb[0].mxu0
    %653 = vmatprep.mubr.f32.mxu0 0.0
    %654 = vmatmul.mubr.f32.gmra.mrb[0].mxu0 %v109
    %v655 = vpop.f32.mrb[0].mxu0
    %v656 = vadd.f32 0.0, %v655
    %v657 = vpop.f32.mrb[0].mxu0
    %658 = vmatprep.mubr.f32.mxu0 0.0
    %659 = vmatmul.mubr.f32.gmra.mrb[0].mxu0 %v110
    %v660 = vpop.f32.mrb[0].mxu0
    %v661 = vadd.f32 0.0, %v660
    %v662 = vpop.f32.mrb[0].mxu0
    %663 = vmatprep.mubr.f32.mxu0 0.0
    %664 = vmatmul.mubr.f32.gmra.mrb[0].mxu0 %v111
    %v665 = vpop.f32.mrb[0].mxu0
    %v666 = vadd.f32 0.0, %v665
    %v667 = vpop.f32.mrb[0].mxu0
    %668 = vmatprep.mubr.f32.mxu0 0.0
    %669 = vmatmul.mubr.f32.gmra.mrb[0].mxu0 %v112
    %v670 = vpop.f32.mrb[0].mxu0
    %v671 = vadd.f32 0.0, %v670
    %v672 = vpop.f32.mrb[0].mxu0
    %673 = vmatprep.mubr.f32.mxu0 0.0
    %674 = vmatmul.mubr.f32.gmra.mrb[0].mxu0 %v113
    %v675 = vpop.f32.mrb[0].mxu0
    %v676 = vadd.f32 0.0, %v675
    %v677 = vpop.f32.mrb[0].mxu0
    %678 = vmatprep.mubr.f32.mxu0 0.0
    %679 = vmatmul.mubr.f32.gmra.mrb[0].mxu0 %v114
    %v680 = vpop.f32.mrb[0].mxu0
    %v681 = vadd.f32 0.0, %v680
    %v682 = vpop.f32.mrb[0].mxu0
    %683 = vmatprep.mubr.f32.mxu0 0.0
    %684 = vmatmul.mubr.f32.gmra.mrb[0].mxu0 %v115
    %v685 = vpop.f32.mrb[0].mxu0
    %v686 = vadd.f32 0.0, %v685
    %v687 = vpop.f32.mrb[0].mxu0
    %688 = vmatprep.mubr.f32.mxu0 0.0
    %689 = vmatmul.mubr.f32.gmra.mrb[0].mxu0 %v116
    %v690 = vpop.f32.mrb[0].mxu0
    %v691 = vadd.f32 0.0, %v690
    %v692 = vpop.f32.mrb[0].mxu0
    %693 = vmatprep.mubr.f32.mxu0 0.0
    %694 = vmatmul.mubr.f32.gmra.mrb[0].mxu0 %v117
    %v695 = vpop.f32.mrb[0].mxu0
    %v696 = vadd.f32 0.0, %v695
    %v697 = vpop.f32.mrb[0].mxu0
    %698 = vmatprep.mubr.f32.mxu0 0.0
    %699 = vmatmul.mubr.f32.gmra.mrb[0].mxu0 %v118
    %v700 = vpop.f32.mrb[0].mxu0
    %v701 = vadd.f32 0.0, %v700
    %v702 = vpop.f32.mrb[0].mxu0
    %703 = vmatprep.mubr.f32.mxu0 0.0
    %704 = vmatmul.mubr.f32.gmra.mrb[0].mxu0 %v119
    %v705 = vpop.f32.mrb[0].mxu0
    %v706 = vadd.f32 0.0, %v705
    %v707 = vpop.f32.mrb[0].mxu0
    %708 = vmatprep.mubr.f32.mxu0 0.0
    %709 = vmatmul.mubr.f32.gmra.mrb[0].mxu0 %v120
    %v710 = vpop.f32.mrb[0].mxu0
    %v711 = vadd.f32 0.0, %v710
    %v712 = vpop.f32.mrb[0].mxu0
    %713 = vmatprep.mubr.f32.mxu0 0.0
    %714 = vmatmul.mubr.f32.gmra.mrb[0].mxu0 %v121
    %v715 = vpop.f32.mrb[0].mxu0
    %v716 = vadd.f32 0.0, %v715
    %v717 = vpop.f32.mrb[0].mxu0
    %718 = vmatprep.mubr.f32.mxu0 0.0
    %719 = vmatmul.mubr.f32.gmra.mrb[0].mxu0 %v122
    %v720 = vpop.f32.mrb[0].mxu0
    %v721 = vadd.f32 0.0, %v720
    %v722 = vpop.f32.mrb[0].mxu0
    %723 = vmatprep.mubr.f32.mxu0 0.0
    %724 = vmatmul.mubr.f32.gmra.mrb[0].mxu0 %v123
    %v725 = vpop.f32.mrb[0].mxu0
    %v726 = vadd.f32 0.0, %v725
    %v727 = vpop.f32.mrb[0].mxu0
    %728 = vmatprep.mubr.f32.mxu0 0.0
    %729 = vmatmul.mubr.f32.gmra.mrb[0].mxu0 %v124
    %v730 = vpop.f32.mrb[0].mxu0
    %v731 = vadd.f32 0.0, %v730
    %v732 = vpop.f32.mrb[0].mxu0
    %733 = vmatprep.mubr.f32.mxu0 0.0
    %734 = vmatmul.mubr.f32.gmra.mrb[0].mxu0 %v125
    %v735 = vpop.f32.mrb[0].mxu0
    %v736 = vadd.f32 0.0, %v735
    %v737 = vpop.f32.mrb[0].mxu0
    %738 = vmatprep.mubr.f32.mxu0 0.0
    %739 = vmatmul.mubr.f32.gmra.mrb[0].mxu0 %v126
    %v740 = vpop.f32.mrb[0].mxu0
    %v741 = vadd.f32 0.0, %v740
    %v742 = vpop.f32.mrb[0].mxu0
    %743 = vmatprep.mubr.f32.mxu0 0.0
    %744 = vmatmul.mubr.f32.gmra.mrb[0].mxu0 %v127
    %v745 = vpop.f32.mrb[0].mxu0
    %v746 = vadd.f32 0.0, %v745
    %v747 = vpop.f32.mrb[0].mxu0
    %748 = vmatprep.mubr.f32.mxu0 0.0
    %749 = vmatmul.mubr.f32.gmra.mrb[0].mxu0 %v128
    %v750 = vpop.f32.mrb[0].mxu0
    %v751 = vadd.f32 0.0, %v750
    %v752 = vpop.f32.mrb[0].mxu0
    %753 = vmatprep.mubr.f32.mxu0 0.0
    %754 = vmatmul.mubr.f32.gmra.mrb[0].mxu0 %v129
    %v755 = vpop.f32.mrb[0].mxu0
    %v756 = vadd.f32 0.0, %v755
    %v757 = vpop.f32.mrb[0].mxu0
    %758 = vmatprep.mubr.f32.mxu0 0.0
    %759 = vmatmul.mubr.f32.gmra.mrb[0].mxu0 %v130
    %v760 = vpop.f32.mrb[0].mxu0
    %v761 = vadd.f32 0.0, %v760
    %v762 = vpop.f32.mrb[0].mxu0
    %763 = vmatprep.mubr.f32.mxu0 0.0
    %764 = vmatmul.mubr.f32.gmra.mrb[0].mxu0 %v131
    %v765 = vpop.f32.mrb[0].mxu0
    %v766 = vadd.f32 0.0, %v765
    %v767 = vpop.f32.mrb[0].mxu0
    %768 = vmatprep.mubr.f32.mxu0 0.0
    %769 = vmatmul.mubr.f32.gmra.mrb[0].mxu0 %v132
    %v770 = vpop.f32.mrb[0].mxu0
    %v771 = vadd.f32 0.0, %v770
    %v772 = vpop.f32.mrb[0].mxu0
    %773 = vmatprep.mubr.f32.mxu0 0.0
    %774 = vmatmul.mubr.f32.gmra.mrb[0].mxu0 %v133
    %v775 = vpop.f32.mrb[0].mxu0
    %v776 = vadd.f32 0.0, %v775
    %v777 = vpop.f32.mrb[0].mxu0
    %778 = vmatprep.mubr.f32.mxu0 0.0
    %779 = vmatmul.mubr.f32.gmra.mrb[0].mxu0 %v134
    %v780 = vpop.f32.mrb[0].mxu0
    %v781 = vadd.f32 0.0, %v780
    %v782 = vpop.f32.mrb[0].mxu0
    %783 = vmatprep.mubr.f32.mxu0 0.0
    %784 = vmatmul.mubr.f32.gmra.mrb[0].mxu0 %v135
    %v785 = vpop.f32.mrb[0].mxu0
    %v786 = vadd.f32 0.0, %v785
    %v787 = vpop.f32.mrb[0].mxu0
    %788 = vmatprep.mubr.f32.mxu0 0.0
    %789 = vmatmul.mubr.f32.gmra.mrb[0].mxu0 %v136
    %v790 = vpop.f32.mrb[0].mxu0
    %v791 = vadd.f32 0.0, %v790
    %v792 = vpop.f32.mrb[0].mxu0
    %793 = vmatprep.mubr.f32.mxu0 0.0
    %794 = vmatmul.mubr.f32.gmra.mrb[0].mxu0 %v137
    %v795 = vpop.f32.mrb[0].mxu0
    %v796 = vadd.f32 0.0, %v795
    %v797 = vpop.f32.mrb[0].mxu0
    %798 = vmatprep.mubr.f32.mxu0 0.0
    %799 = vmatmul.mubr.f32.gmra.mrb[0].mxu0 %v138
    %v800 = vpop.f32.mrb[0].mxu0
    %v801 = vadd.f32 0.0, %v800
    %v802 = vpop.f32.mrb[0].mxu0
    %803 = vmatprep.mubr.f32.mxu0 0.0
    %804 = vmatmul.mubr.f32.gmra.mrb[0].mxu0 %v139
    %v805 = vpop.f32.mrb[0].mxu0
    %v806 = vadd.f32 0.0, %v805
    %v807 = vpop.f32.mrb[0].mxu0
    %808 = vmatprep.mubr.f32.mxu0 0.0
    %809 = vmatmul.mubr.f32.gmra.mrb[0].mxu0 %v140
    %v810 = vpop.f32.mrb[0].mxu0
    %v811 = vadd.f32 0.0, %v810
    %v812 = vpop.f32.mrb[0].mxu0
    %813 = vmatprep.mubr.f32.mxu0 0.0
    %814 = vmatmul.mubr.f32.gmra.mrb[0].mxu0 %v141
    %v815 = vpop.f32.mrb[0].mxu0
    %v816 = vadd.f32 0.0, %v815
    %v817 = vpop.f32.mrb[0].mxu0
    %818 = vmatprep.mubr.f32.mxu0 0.0
    %819 = vmatmul.mubr.f32.gmra.mrb[0].mxu0 %v142
    %v820 = vpop.f32.mrb[0].mxu0
    %v821 = vadd.f32 0.0, %v820
    %v822 = vpop.f32.mrb[0].mxu0
    %823 = vmatprep.mubr.f32.mxu0 0.0
    %824 = vmatmul.mubr.f32.gmra.mrb[0].mxu0 %v143
    %v825 = vpop.f32.mrb[0].mxu0
    %v826 = vadd.f32 0.0, %v825
    %v827 = vpop.f32.mrb[0].mxu0
    %828 = vmatprep.mubr.f32.mxu0 0.0
    %829 = vmatmul.mubr.f32.gmra.mrb[0].mxu0 %v144
    %v830 = vpop.f32.mrb[0].mxu0
    %v831 = vadd.f32 0.0, %v830
    %v832 = vpop.f32.mrb[0].mxu0
    %833 = vmatprep.mubr.f32.mxu0 0.0
    %834 = vmatmul.mubr.f32.gmra.mrb[0].mxu0 %v145
    %v835 = vpop.f32.mrb[0].mxu0
    %v836 = vadd.f32 0.0, %v835
    %v837 = vpop.f32.mrb[0].mxu0
    %838 = vmatprep.mubr.f32.mxu0 0.0
    %839 = vmatmul.mubr.f32.gmra.mrb[0].mxu0 %v146
    %v840 = vpop.f32.mrb[0].mxu0
    %v841 = vadd.f32 0.0, %v840
    %v842 = vpop.f32.mrb[0].mxu0
    %843 = vmatprep.mubr.f32.mxu0 0.0
    %844 = vmatmul.mubr.f32.gmra.mrb[0].mxu0 %v147
    %v845 = vpop.f32.mrb[0].mxu0
    %v846 = vadd.f32 0.0, %v845
    %v847 = vpop.f32.mrb[0].mxu0
    %848 = vmatprep.mubr.f32.mxu0 0.0
    %849 = vmatmul.mubr.f32.gmra.mrb[0].mxu0 %v148
    %v850 = vpop.f32.mrb[0].mxu0
    %v851 = vadd.f32 0.0, %v850
    %v852 = vpop.f32.mrb[0].mxu0
    %853 = vmatprep.mubr.f32.mxu0 0.0
    %854 = vmatmul.mubr.f32.gmra.mrb[0].mxu0 %v149
    %v855 = vpop.f32.mrb[0].mxu0
    %v856 = vadd.f32 0.0, %v855
    %v857 = vpop.f32.mrb[0].mxu0
    %858 = vmatprep.mubr.f32.mxu0 0.0
    %859 = vmatmul.mubr.f32.gmra.mrb[0].mxu0 %v150
    %v860 = vpop.f32.mrb[0].mxu0
    %v861 = vadd.f32 0.0, %v860
    %v862 = vpop.f32.mrb[0].mxu0
    %863 = vmatprep.mubr.f32.mxu0 0.0
    %864 = vmatmul.mubr.f32.gmra.mrb[0].mxu0 %v151
    %v865 = vpop.f32.mrb[0].mxu0
    %v866 = vadd.f32 0.0, %v865
    %v867 = vpop.f32.mrb[0].mxu0
    %868 = vmatprep.mubr.f32.mxu0 0.0
    %869 = vmatmul.mubr.f32.gmra.mrb[0].mxu0 %v152
    %v870 = vpop.f32.mrb[0].mxu0
    %v871 = vadd.f32 0.0, %v870
    %v872 = vpop.f32.mrb[0].mxu0
    %873 = vdwg.mxu0
    %vm874 = vcmask 7168
    %875 = vst.msk [vmem:[%s2] sm:$0xff] %vm874, %v236
    %876 = vst.msk [vmem:[%s2 + $0x8] sm:$0xff] %vm874, %v241
    %877 = vst.msk [vmem:[%s2 + $0x10] sm:$0xff] %vm874, %v246
    %878 = vst.msk [vmem:[%s2 + $0x18] sm:$0xff] %vm874, %v251
    %879 = vst.msk [vmem:[%s2 + $0x20] sm:$0xff] %vm874, %v256
    %880 = vst.msk [vmem:[%s2 + $0x28] sm:$0xff] %vm874, %v261
    %881 = vst.msk [vmem:[%s2 + $0x30] sm:$0xff] %vm874, %v266
    %882 = vst.msk [vmem:[%s2 + $0x38] sm:$0xff] %vm874, %v271
    %883 = vst.msk [vmem:[%s2 + $0x40] sm:$0xff] %vm874, %v276
    %884 = vst.msk [vmem:[%s2 + $0x48] sm:$0xff] %vm874, %v281
    %885 = vst.msk [vmem:[%s2 + $0x50] sm:$0xff] %vm874, %v286
    %886 = vst.msk [vmem:[%s2 + $0x58] sm:$0xff] %vm874, %v291
    %887 = vst.msk [vmem:[%s2 + $0x60] sm:$0xff] %vm874, %v296
    %888 = vst.msk [vmem:[%s2 + $0x68] sm:$0xff] %vm874, %v301
    %889 = vst.msk [vmem:[%s2 + $0x70] sm:$0xff] %vm874, %v306
    %890 = vst.msk [vmem:[%s2 + $0x78] sm:$0xff] %vm874, %v311
    %891 = vst.msk [vmem:[%s2 + $0x80] sm:$0xff] %vm874, %v316
    %892 = vst.msk [vmem:[%s2 + $0x88] sm:$0xff] %vm874, %v321
    %893 = vst.msk [vmem:[%s2 + $0x90] sm:$0xff] %vm874, %v326
    %894 = vst.msk [vmem:[%s2 + $0x98] sm:$0xff] %vm874, %v331
    %895 = vst.msk [vmem:[%s2 + $0xa0] sm:$0xff] %vm874, %v336
    %896 = vst.msk [vmem:[%s2 + $0xa8] sm:$0xff] %vm874, %v341
    %897 = vst.msk [vmem:[%s2 + $0xb0] sm:$0xff] %vm874, %v346
    %898 = vst.msk [vmem:[%s2 + $0xb8] sm:$0xff] %vm874, %v351
    %899 = vst.msk [vmem:[%s2 + $0xc0] sm:$0xff] %vm874, %v356
    %900 = vst.msk [vmem:[%s2 + $0xc8] sm:$0xff] %vm874, %v361
    %901 = vst.msk [vmem:[%s2 + $0xd0] sm:$0xff] %vm874, %v366
    %902 = vst.msk [vmem:[%s2 + $0xd8] sm:$0xff] %vm874, %v371
    %903 = vst.msk [vmem:[%s2 + $0xe0] sm:$0xff] %vm874, %v376
    %904 = vst.msk [vmem:[%s2 + $0xe8] sm:$0xff] %vm874, %v381
    %905 = vst.msk [vmem:[%s2 + $0xf0] sm:$0xff] %vm874, %v386
    %906 = vst.msk [vmem:[%s2 + $0xf8] sm:$0xff] %vm874, %v391
    %907 = vst.msk [vmem:[%s2 + $0x100] sm:$0xff] %vm874, %v396
    %908 = vst.msk [vmem:[%s2 + $0x108] sm:$0xff] %vm874, %v401
    %909 = vst.msk [vmem:[%s2 + $0x110] sm:$0xff] %vm874, %v406
    %910 = vst.msk [vmem:[%s2 + $0x118] sm:$0xff] %vm874, %v411
    %911 = vst.msk [vmem:[%s2 + $0x120] sm:$0xff] %vm874, %v416
    %912 = vst.msk [vmem:[%s2 + $0x128] sm:$0xff] %vm874, %v421
    %913 = vst.msk [vmem:[%s2 + $0x130] sm:$0xff] %vm874, %v426
    %914 = vst.msk [vmem:[%s2 + $0x138] sm:$0xff] %vm874, %v431
    %915 = vst.msk [vmem:[%s2 + $0x140] sm:$0xff] %vm874, %v436
    %916 = vst.msk [vmem:[%s2 + $0x148] sm:$0xff] %vm874, %v441
    %917 = vst.msk [vmem:[%s2 + $0x150] sm:$0xff] %vm874, %v446
    %918 = vst.msk [vmem:[%s2 + $0x158] sm:$0xff] %vm874, %v451
    %919 = vst.msk [vmem:[%s2 + $0x160] sm:$0xff] %vm874, %v456
    %920 = vst.msk [vmem:[%s2 + $0x168] sm:$0xff] %vm874, %v461
    %921 = vst.msk [vmem:[%s2 + $0x170] sm:$0xff] %vm874, %v466
    %922 = vst.msk [vmem:[%s2 + $0x178] sm:$0xff] %vm874, %v471
    %923 = vst.msk [vmem:[%s2 + $0x180] sm:$0xff] %vm874, %v476
    %924 = vst.msk [vmem:[%s2 + $0x188] sm:$0xff] %vm874, %v481
    %925 = vst.msk [vmem:[%s2 + $0x190] sm:$0xff] %vm874, %v486
    %926 = vst.msk [vmem:[%s2 + $0x198] sm:$0xff] %vm874, %v491
    %927 = vst.msk [vmem:[%s2 + $0x1a0] sm:$0xff] %vm874, %v496
    %928 = vst.msk [vmem:[%s2 + $0x1a8] sm:$0xff] %vm874, %v501
    %929 = vst.msk [vmem:[%s2 + $0x1b0] sm:$0xff] %vm874, %v506
    %930 = vst.msk [vmem:[%s2 + $0x1b8] sm:$0xff] %vm874, %v511
    %931 = vst.msk [vmem:[%s2 + $0x1c0] sm:$0xff] %vm874, %v516
    %932 = vst.msk [vmem:[%s2 + $0x1c8] sm:$0xff] %vm874, %v521
    %933 = vst.msk [vmem:[%s2 + $0x1d0] sm:$0xff] %vm874, %v526
    %934 = vst.msk [vmem:[%s2 + $0x1d8] sm:$0xff] %vm874, %v531
    %935 = vst.msk [vmem:[%s2 + $0x1e0] sm:$0xff] %vm874, %v536
    %936 = vst.msk [vmem:[%s2 + $0x1e8] sm:$0xff] %vm874, %v541
    %937 = vst.msk [vmem:[%s2 + $0x1f0] sm:$0xff] %vm874, %v546
    %938 = vst.msk [vmem:[%s2 + $0x1f8] sm:$0xff] %vm874, %v551
    %939 = vst.msk [vmem:[%s2 + $0x200] sm:$0xff] %vm874, %v556
    %940 = vst.msk [vmem:[%s2 + $0x208] sm:$0xff] %vm874, %v561
    %941 = vst.msk [vmem:[%s2 + $0x210] sm:$0xff] %vm874, %v566
    %942 = vst.msk [vmem:[%s2 + $0x218] sm:$0xff] %vm874, %v571
    %943 = vst.msk [vmem:[%s2 + $0x220] sm:$0xff] %vm874, %v576
    %944 = vst.msk [vmem:[%s2 + $0x228] sm:$0xff] %vm874, %v581
    %945 = vst.msk [vmem:[%s2 + $0x230] sm:$0xff] %vm874, %v586
    %946 = vst.msk [vmem:[%s2 + $0x238] sm:$0xff] %vm874, %v591
    %947 = vst.msk [vmem:[%s2 + $0x240] sm:$0xff] %vm874, %v596
    %948 = vst.msk [vmem:[%s2 + $0x248] sm:$0xff] %vm874, %v601
    %949 = vst.msk [vmem:[%s2 + $0x250] sm:$0xff] %vm874, %v606
    %950 = vst.msk [vmem:[%s2 + $0x258] sm:$0xff] %vm874, %v611
    %951 = vst.msk [vmem:[%s2 + $0x260] sm:$0xff] %vm874, %v616
    %952 = vst.msk [vmem:[%s2 + $0x268] sm:$0xff] %vm874, %v621
    %953 = vst.msk [vmem:[%s2 + $0x270] sm:$0xff] %vm874, %v626
    %954 = vst.msk [vmem:[%s2 + $0x278] sm:$0xff] %vm874, %v631
    %955 = vst.msk [vmem:[%s2 + $0x280] sm:$0xff] %vm874, %v636
    %956 = vst.msk [vmem:[%s2 + $0x288] sm:$0xff] %vm874, %v641
    %957 = vst.msk [vmem:[%s2 + $0x290] sm:$0xff] %vm874, %v646
    %958 = vst.msk [vmem:[%s2 + $0x298] sm:$0xff] %vm874, %v651
    %959 = vst.msk [vmem:[%s2 + $0x2a0] sm:$0xff] %vm874, %v656
    %960 = vst.msk [vmem:[%s2 + $0x2a8] sm:$0xff] %vm874, %v661
    %961 = vst.msk [vmem:[%s2 + $0x2b0] sm:$0xff] %vm874, %v666
    %962 = vst.msk [vmem:[%s2 + $0x2b8] sm:$0xff] %vm874, %v671
    %963 = vst.msk [vmem:[%s2 + $0x2c0] sm:$0xff] %vm874, %v676
    %964 = vst.msk [vmem:[%s2 + $0x2c8] sm:$0xff] %vm874, %v681
    %965 = vst.msk [vmem:[%s2 + $0x2d0] sm:$0xff] %vm874, %v686
    %966 = vst.msk [vmem:[%s2 + $0x2d8] sm:$0xff] %vm874, %v691
    %967 = vst.msk [vmem:[%s2 + $0x2e0] sm:$0xff] %vm874, %v696
    %968 = vst.msk [vmem:[%s2 + $0x2e8] sm:$0xff] %vm874, %v701
    %969 = vst.msk [vmem:[%s2 + $0x2f0] sm:$0xff] %vm874, %v706
    %970 = vst.msk [vmem:[%s2 + $0x2f8] sm:$0xff] %vm874, %v711
    %971 = vst.msk [vmem:[%s2 + $0x300] sm:$0xff] %vm874, %v716
    %972 = vst.msk [vmem:[%s2 + $0x308] sm:$0xff] %vm874, %v721
    %973 = vst.msk [vmem:[%s2 + $0x310] sm:$0xff] %vm874, %v726
    %974 = vst.msk [vmem:[%s2 + $0x318] sm:$0xff] %vm874, %v731
    %975 = vst.msk [vmem:[%s2 + $0x320] sm:$0xff] %vm874, %v736
    %976 = vst.msk [vmem:[%s2 + $0x328] sm:$0xff] %vm874, %v741
    %977 = vst.msk [vmem:[%s2 + $0x330] sm:$0xff] %vm874, %v746
    %978 = vst.msk [vmem:[%s2 + $0x338] sm:$0xff] %vm874, %v751
    %979 = vst.msk [vmem:[%s2 + $0x340] sm:$0xff] %vm874, %v756
    %980 = vst.msk [vmem:[%s2 + $0x348] sm:$0xff] %vm874, %v761
    %981 = vst.msk [vmem:[%s2 + $0x350] sm:$0xff] %vm874, %v766
    %982 = vst.msk [vmem:[%s2 + $0x358] sm:$0xff] %vm874, %v771
    %983 = vst.msk [vmem:[%s2 + $0x360] sm:$0xff] %vm874, %v776
    %984 = vst.msk [vmem:[%s2 + $0x368] sm:$0xff] %vm874, %v781
    %985 = vst.msk [vmem:[%s2 + $0x370] sm:$0xff] %vm874, %v786
    %986 = vst.msk [vmem:[%s2 + $0x378] sm:$0xff] %vm874, %v791
    %987 = vst.msk [vmem:[%s2 + $0x380] sm:$0xff] %vm874, %v796
    %988 = vst.msk [vmem:[%s2 + $0x388] sm:$0xff] %vm874, %v801
    %989 = vst.msk [vmem:[%s2 + $0x390] sm:$0xff] %vm874, %v806
    %990 = vst.msk [vmem:[%s2 + $0x398] sm:$0xff] %vm874, %v811
    %991 = vst.msk [vmem:[%s2 + $0x3a0] sm:$0xff] %vm874, %v816
    %992 = vst.msk [vmem:[%s2 + $0x3a8] sm:$0xff] %vm874, %v821
    %993 = vst.msk [vmem:[%s2 + $0x3b0] sm:$0xff] %vm874, %v826
    %994 = vst.msk [vmem:[%s2 + $0x3b8] sm:$0xff] %vm874, %v831
    %995 = vst.msk [vmem:[%s2 + $0x3c0] sm:$0xff] %vm874, %v836
    %996 = vst.msk [vmem:[%s2 + $0x3c8] sm:$0xff] %vm874, %v841
    %997 = vst.msk [vmem:[%s2 + $0x3d0] sm:$0xff] %vm874, %v846
    %998 = vst.msk [vmem:[%s2 + $0x3d8] sm:$0xff] %vm874, %v851
    %999 = vst.msk [vmem:[%s2 + $0x3e0] sm:$0xff] %vm874, %v856
    %1000 = vst.msk [vmem:[%s2 + $0x3e8] sm:$0xff] %vm874, %v861
    %1001 = vst.msk [vmem:[%s2 + $0x3f0] sm:$0xff] %vm874, %v866
    %1002 = vst.msk [vmem:[%s2 + $0x3f8] sm:$0xff] %vm874, %v871
    // Predicated region
    $region14: #{tpu_custom_call.1} parent=1 // pred_check
      _
    $region15: #{tpu_custom_call.1} parent=1 // pred_check_branch
      %1004 = sbr.rel (0) target = $region17
    $region16: #{tpu_custom_call.1} parent=1 // pred_region
      _
    $region17: #{tpu_custom_call.1} parent=1 // pred_fallthru
      _
    // Predicated region
    $region18: #{tpu_custom_call.1} parent=1 // pred_check
      _
    $region19: #{tpu_custom_call.1} parent=1 // pred_check_branch
      %1006 = sbr.rel (0) target = $region21
    $region20: #{tpu_custom_call.1} parent=1 // pred_region
      _
    $region21: #{tpu_custom_call.1} parent=1 // pred_fallthru
      _
    %1007 = vsyncpa [#allocation3], 1

</llo_original>
